<compile_context>
chip_gen: v6e
topology: v6e:2x2x1
jax: 0.10.0
libtpu: 0.0.40
codegen_flags: <defaults>
</compile_context>

<pallas_src>
import functools

import jax
import jax.numpy as jnp
from jax.experimental import pallas as pl
from jax.experimental.pallas import tpu as pltpu


def _round_up(x, m):
    return ((x + m - 1) // m) * m


def _cdiv(a, b):
    return -(-a // b)


# ---------------------------------------------------------------------------
# Kernel
# ---------------------------------------------------------------------------
def _mlp_kernel(x_ref, w1_ref, b1_ref, w2_ref, b2_ref, w3_ref, b3_ref,
                w4_ref, b4_ref, o_ref, *, bf16_elementwise):
    """4-layer MLP, feature-major: x (5, TN) -> out (2, TN).

    Weights are LHS (out, K), activations RHS (K, TN): the 128-wide lane axis
    always carries the pixel dimension (lane-dense loads/stores/bias/relu).
    """

    def layer(w_ref, b_ref, h, relu):
        y = jnp.dot(w_ref[...], h, preferred_element_type=jnp.float32)
        y = y + b_ref[...]                                    # f32 bias add
        if not relu:
            return y
        if bf16_elementwise:
            # v6e/v7x: bf16 VALU present -> halve elementwise vreg traffic.
            return jnp.maximum(y.astype(jnp.bfloat16), 0.0)
        # v5e: no bf16 VALU -> keep the relu in f32, cast only for the MXU.
        return jnp.maximum(y, 0.0).astype(jnp.bfloat16)

    h = x_ref[...]                                            # (5, TN) bf16
    h = layer(w1_ref, b1_ref, h, relu=True)                   # (64, TN)
    # dropout(p=0.05) -> identity (eval mode)
    h = layer(w2_ref, b2_ref, h, relu=True)                   # (64, TN)
    h = layer(w3_ref, b3_ref, h, relu=True)                   # (64, TN)
    out = layer(w4_ref, b4_ref, h, relu=False)                # (2, TN) f32
    o_ref[...] = out.astype(o_ref.dtype)


# ---------------------------------------------------------------------------
# Wrapper helpers
# ---------------------------------------------------------------------------
def _prepare_weights(params, compute_dtype):
    """torch-layout params (w: [out, in], b: [out]) -> kernel operands."""
    ops = []
    for i in range(1, 5):
        ops.append(params[f"w{i}"].astype(compute_dtype))          # (out, in)
        ops.append(params[f"b{i}"][:, None].astype(jnp.float32))   # (out, 1)
    return tuple(ops)


def _vmem_capacity_bytes():
    try:
        return int(pltpu.get_tpu_info().vmem_capacity_bytes)
    except Exception:
        return 64 * 2**20            # conservative: v7x per-TensorCore VMEM


def _default_bf16_elementwise():
    try:
        kind = jax.devices()[0].device_kind.lower()
    except Exception:
        return True
    # v5e has no bf16 VALU; keep the elementwise chain in f32 there.
    return not any(s in kind for s in ("v5 lite", "v5e", "v5lite"))


def _choose_tiling(n, tile_cap):
    """Pick (tile, grid): tile % 128 == 0, grid even (>=2) when N allows so
    v7x's two TensorCores both get work; pad waste bounded by grid*128 rows."""
    n_align = _round_up(max(n, 1), 128)
    if n_align <= 128:
        return 128, 1
    grid = max(2, _cdiv(n_align, tile_cap))
    if grid % 2:
        grid += 1
    tile = _round_up(_cdiv(n_align, grid), 128)
    return tile, grid


# ---------------------------------------------------------------------------
# Public forward
# ---------------------------------------------------------------------------
def rgb2normnet_r15(x, params, *, tile_n=None, compute_dtype=jnp.bfloat16,
                    bf16_elementwise=None):
    """Forward pass.  x: [N, 5] float32.  params: torch-layout weights/biases.

    Returns [N, 2] float32 (RGB2NormNetR15.forward semantics in eval mode).
    `tile_n` (optional) caps the per-step tile; the actual tile/grid are
    chosen adaptively per generation.
    """
    N, in_dim = x.shape
    assert in_dim == 5, in_dim

    vmem_cap = _vmem_capacity_bytes()
    # Generation-aware tile cap: ~16K on 64 MiB-VMEM parts (v7x), ~32K on
    # 128 MiB parts (v5e/v6e).
    cap = 16384 if vmem_cap <= 80 * 2**20 else 32768
    if tile_n is not None:
        cap = max(128, _round_up(min(tile_n, cap), 128))
    tile, grid_n = _choose_tiling(N, cap)
    n_pad = tile * grid_n

    if bf16_elementwise is None:
        bf16_elementwise = _default_bf16_elementwise()

    # Feature-major input: (5, n_pad) bf16.  No ones/zeros rows; b1 is a
    # regular f32 bias in-kernel.  Block (5, tile) is legal (5 == full dim).
    xt = x.T.astype(compute_dtype)
    if n_pad > N:
        xt = jnp.pad(xt, ((0, 0), (0, n_pad - N)))

    operands = _prepare_weights(params, compute_dtype)
    weight_bytes = sum(int(a.size * a.dtype.itemsize) for a in operands)

    # Cost hint for XLA's scheduler around the custom call.
    flops = 2 * n_pad * (5 * 64 + 64 * 64 + 64 * 64 + 64 * 2)
    bytes_accessed = (int(xt.size * xt.dtype.itemsize) + n_pad * 2 * 4
                      + weight_bytes)
    cost = pl.CostEstimate(flops=flops, transcendentals=0,
                           bytes_accessed=bytes_accessed)

    # VMEM: double-buffered x/out tiles + single-buffered weights + live
    # activations (f32 dot result + bf16 copies + slop), capped at 3/4 of this
    # generation's physical VMEM.
    bytes_per_step = (
        2 * 5 * tile * xt.dtype.itemsize      # x tile (double buffered)
        + 2 * 2 * tile * 4                    # out tile (double buffered)
        + weight_bytes                        # weights/biases (single buffer)
        + 3 * 64 * tile * 4                   # live activations + headroom
    )
    vmem_limit = int(min((vmem_cap * 3) // 4,
                         max(32 * 2**20, 2 * bytes_per_step)))

    def const_spec(arr):
        imap = lambda i: (0,) * arr.ndim
        try:   # constant operands never change -> no double-buffering needed
            return pl.BlockSpec(arr.shape, imap, pipeline_mode=pl.Buffered(1))
        except Exception:
            return pl.BlockSpec(arr.shape, imap)

    out_t = pl.pallas_call(
        functools.partial(_mlp_kernel, bf16_elementwise=bf16_elementwise),
        out_shape=jax.ShapeDtypeStruct((2, n_pad), jnp.float32),
        grid_spec=pltpu.PrefetchScalarGridSpec(
            num_scalar_prefetch=0,
            grid=(grid_n,),
            in_specs=[pl.BlockSpec((5, tile), lambda i: (0, i))]
                     + [const_spec(a) for a in operands],
            out_specs=pl.BlockSpec((2, tile), lambda i: (0, i)),
        ),
        compiler_params=pltpu.CompilerParams(
            dimension_semantics=("parallel",),
            vmem_limit_bytes=vmem_limit),
        cost_estimate=cost,
    )(xt, *operands)

    # Back to the module's [N, 2] interface (drop padding, batch-major).
    return out_t[:, :N].T.astype(jnp.float32)


# ---------------------------------------------------------------------------
# Init + reference
# ---------------------------------------------------------------------------
def init_params(key):
    """Deterministic init mimicking nn.Linear default (+/- 1/sqrt(fan_in)).

    torch layout: w{i}: [out, in], b{i}: [out].
    """
    dims = [(5, 64), (64, 64), (64, 64), (64, 2)]
    params = {}
    for idx, (fan_in, fan_out) in enumerate(dims, start=1):
        key, kw, kb = jax.random.split(key, 3)
        bound = 1.0 / jnp.sqrt(float(fan_in))
        params[f"w{idx}"] = jax.random.uniform(
            kw, (fan_out, fan_in), jnp.float32, -bound, bound)
        params[f"b{idx}"] = jax.random.uniform(
            kb, (fan_out,), jnp.float32, -bound, bound)
    return params


def reference_forward(x, params):
    """Pure-JAX f32 reference matching the PyTorch module in eval mode."""
    h = jnp.maximum(x @ params["w1"].T + params["b1"], 0.0)
    h = jnp.maximum(h @ params["w2"].T + params["b2"], 0.0)
    h = jnp.maximum(h @ params["w3"].T + params["b3"], 0.0)
    return h @ params["w4"].T + params["b4"]


if __name__ == "__main__":
    key = jax.random.PRNGKey(0)
    key, kx = jax.random.split(key)
    params = init_params(key)

    fwd = jax.jit(rgb2normnet_r15)

    # N=400: not a multiple of 128 -> exercises padding + even (grid=2) path.
    # N=77:  tiny-N path (single grid step).
    for N in (400, 77):
        x = jax.random.normal(jax.random.fold_in(kx, N), (N, 5), jnp.float32)
        out = jax.block_until_ready(fwd(x, params))
        ref = reference_forward(x, params)
        assert out.shape == (N, 2), out.shape
        # bf16 MXU inputs with f32 accumulation -> looser tolerance vs f32 ref.
        assert jnp.allclose(out, ref, atol=2e-2, rtol=2e-2), (
            N, float(jnp.max(jnp.abs(out - ref))))

    print("KERNEL_OK")
</pallas_src>

<mosaic_0001>
module attributes {stable_mosaic.version = 11 : i64} {
  func.func @_mlp_kernel(%arg0: i32, %arg1: memref<5x256xbf16, #tpu.memory_space<vmem>>, %arg2: memref<64x5xbf16, #tpu.memory_space<vmem>>, %arg3: memref<64x1xf32, #tpu.memory_space<vmem>>, %arg4: memref<64x64xbf16, #tpu.memory_space<vmem>>, %arg5: memref<64x1xf32, #tpu.memory_space<vmem>>, %arg6: memref<64x64xbf16, #tpu.memory_space<vmem>>, %arg7: memref<64x1xf32, #tpu.memory_space<vmem>>, %arg8: memref<2x64xbf16, #tpu.memory_space<vmem>>, %arg9: memref<2x1xf32, #tpu.memory_space<vmem>>, %arg10: memref<2x256xf32, #tpu.memory_space<vmem>>) attributes {dimension_semantics = [#tpu.dimension_semantics<parallel>], iteration_bounds = array<i64: 2>, scalar_prefetch = 0 : i64, scratch_operands = 0 : i64, tpu.core_type = #tpu.core_type<tc>, window_params = [{transform_indices = @transform_0, window_bounds = array<i64: 5, 256>}, {pipeline_mode = #tpu.pipeline_mode<synchronous>, transform_indices = @transform_1, window_bounds = array<i64: 64, 5>}, {pipeline_mode = #tpu.pipeline_mode<synchronous>, transform_indices = @transform_2, window_bounds = array<i64: 64, 1>}, {pipeline_mode = #tpu.pipeline_mode<synchronous>, transform_indices = @transform_3, window_bounds = array<i64: 64, 64>}, {pipeline_mode = #tpu.pipeline_mode<synchronous>, transform_indices = @transform_4, window_bounds = array<i64: 64, 1>}, {pipeline_mode = #tpu.pipeline_mode<synchronous>, transform_indices = @transform_5, window_bounds = array<i64: 64, 64>}, {pipeline_mode = #tpu.pipeline_mode<synchronous>, transform_indices = @transform_6, window_bounds = array<i64: 64, 1>}, {pipeline_mode = #tpu.pipeline_mode<synchronous>, transform_indices = @transform_7, window_bounds = array<i64: 2, 64>}, {pipeline_mode = #tpu.pipeline_mode<synchronous>, transform_indices = @transform_8, window_bounds = array<i64: 2, 1>}, {transform_indices = @transform_9, window_bounds = array<i64: 2, 256>}]} {
    %c0 = arith.constant 0 : index
    %c0_0 = arith.constant 0 : index
    %0 = vector.load %arg1[%c0, %c0_0] : memref<5x256xbf16, #tpu.memory_space<vmem>>, vector<5x256xbf16>
    %c0_1 = arith.constant 0 : index
    %c0_2 = arith.constant 0 : index
    %1 = vector.load %arg2[%c0_1, %c0_2] : memref<64x5xbf16, #tpu.memory_space<vmem>>, vector<64x5xbf16>
    %cst = arith.constant dense<0.000000e+00> : vector<64x256xf32>
    %2 = tpu.matmul %1, %0, %cst {dimension_numbers = #tpu.dot_dimension_numbers<[1], [0], [0], [1], [0, 0, 1, 1], [], []>} : vector<64x5xbf16>, vector<5x256xbf16>, vector<64x256xf32> -> vector<64x256xf32>
    %c0_3 = arith.constant 0 : index
    %c0_4 = arith.constant 0 : index
    %3 = vector.load %arg3[%c0_3, %c0_4] : memref<64x1xf32, #tpu.memory_space<vmem>>, vector<64x1xf32>
    %4 = vector.broadcast %3 : vector<64x1xf32> to vector<64x256xf32>
    %5 = arith.addf %2, %4 : vector<64x256xf32>
    %6 = arith.truncf %5 : vector<64x256xf32> to vector<64x256xbf16>
    %cst_5 = arith.constant 0.000000e+00 : bf16
    %7 = vector.broadcast %cst_5 : bf16 to vector<64x256xbf16>
    %8 = arith.maximumf %6, %7 : vector<64x256xbf16>
    %c0_6 = arith.constant 0 : index
    %c0_7 = arith.constant 0 : index
    %9 = vector.load %arg4[%c0_6, %c0_7] : memref<64x64xbf16, #tpu.memory_space<vmem>>, vector<64x64xbf16>
    %cst_8 = arith.constant dense<0.000000e+00> : vector<64x256xf32>
    %10 = tpu.matmul %9, %8, %cst_8 {dimension_numbers = #tpu.dot_dimension_numbers<[1], [0], [0], [1], [0, 0, 1, 1], [], []>} : vector<64x64xbf16>, vector<64x256xbf16>, vector<64x256xf32> -> vector<64x256xf32>
    %c0_9 = arith.constant 0 : index
    %c0_10 = arith.constant 0 : index
    %11 = vector.load %arg5[%c0_9, %c0_10] : memref<64x1xf32, #tpu.memory_space<vmem>>, vector<64x1xf32>
    %12 = vector.broadcast %11 : vector<64x1xf32> to vector<64x256xf32>
    %13 = arith.addf %10, %12 : vector<64x256xf32>
    %14 = arith.truncf %13 : vector<64x256xf32> to vector<64x256xbf16>
    %cst_11 = arith.constant 0.000000e+00 : bf16
    %15 = vector.broadcast %cst_11 : bf16 to vector<64x256xbf16>
    %16 = arith.maximumf %14, %15 : vector<64x256xbf16>
    %c0_12 = arith.constant 0 : index
    %c0_13 = arith.constant 0 : index
    %17 = vector.load %arg6[%c0_12, %c0_13] : memref<64x64xbf16, #tpu.memory_space<vmem>>, vector<64x64xbf16>
    %cst_14 = arith.constant dense<0.000000e+00> : vector<64x256xf32>
    %18 = tpu.matmul %17, %16, %cst_14 {dimension_numbers = #tpu.dot_dimension_numbers<[1], [0], [0], [1], [0, 0, 1, 1], [], []>} : vector<64x64xbf16>, vector<64x256xbf16>, vector<64x256xf32> -> vector<64x256xf32>
    %c0_15 = arith.constant 0 : index
    %c0_16 = arith.constant 0 : index
    %19 = vector.load %arg7[%c0_15, %c0_16] : memref<64x1xf32, #tpu.memory_space<vmem>>, vector<64x1xf32>
    %20 = vector.broadcast %19 : vector<64x1xf32> to vector<64x256xf32>
    %21 = arith.addf %18, %20 : vector<64x256xf32>
    %22 = arith.truncf %21 : vector<64x256xf32> to vector<64x256xbf16>
    %cst_17 = arith.constant 0.000000e+00 : bf16
    %23 = vector.broadcast %cst_17 : bf16 to vector<64x256xbf16>
    %24 = arith.maximumf %22, %23 : vector<64x256xbf16>
    %c0_18 = arith.constant 0 : index
    %c0_19 = arith.constant 0 : index
    %25 = vector.load %arg8[%c0_18, %c0_19] : memref<2x64xbf16, #tpu.memory_space<vmem>>, vector<2x64xbf16>
    %cst_20 = arith.constant dense<0.000000e+00> : vector<2x256xf32>
    %26 = tpu.matmul %25, %24, %cst_20 {dimension_numbers = #tpu.dot_dimension_numbers<[1], [0], [0], [1], [0, 0, 1, 1], [], []>} : vector<2x64xbf16>, vector<64x256xbf16>, vector<2x256xf32> -> vector<2x256xf32>
    %c0_21 = arith.constant 0 : index
    %c0_22 = arith.constant 0 : index
    %27 = vector.load %arg9[%c0_21, %c0_22] : memref<2x1xf32, #tpu.memory_space<vmem>>, vector<2x1xf32>
    %28 = vector.broadcast %27 : vector<2x1xf32> to vector<2x256xf32>
    %29 = arith.addf %26, %28 : vector<2x256xf32>
    %c0_23 = arith.constant 0 : index
    %c0_24 = arith.constant 0 : index
    %30 = vector.load %arg10[%c0_23, %c0_24] : memref<2x256xf32, #tpu.memory_space<vmem>>, vector<2x256xf32>
    tpu.vector_store %arg10[%c0_23, %c0_24], %29 {strides = array<i32>} : memref<2x256xf32, #tpu.memory_space<vmem>>, vector<2x256xf32>,
    return
  }
  func.func @transform_0(%arg0: i32) -> (i32, i32) {
    %c0_i32 = arith.constant 0 : i32
    %c0_i32_0 = arith.constant 0 : i32
    return %c0_i32, %arg0 : i32, i32
  }
  func.func @transform_1(%arg0: i32) -> (i32, i32) {
    %c0_i32 = arith.constant 0 : i32
    %c0_i32_0 = arith.constant 0 : i32
    %c0_i32_1 = arith.constant 0 : i32
    return %c0_i32, %c0_i32_0 : i32, i32
  }
  func.func @transform_2(%arg0: i32) -> (i32, i32) {
    %c0_i32 = arith.constant 0 : i32
    %c0_i32_0 = arith.constant 0 : i32
    %c0_i32_1 = arith.constant 0 : i32
    return %c0_i32, %c0_i32_0 : i32, i32
  }
  func.func @transform_3(%arg0: i32) -> (i32, i32) {
    %c0_i32 = arith.constant 0 : i32
    %c0_i32_0 = arith.constant 0 : i32
    %c0_i32_1 = arith.constant 0 : i32
    return %c0_i32, %c0_i32_0 : i32, i32
  }
  func.func @transform_4(%arg0: i32) -> (i32, i32) {
    %c0_i32 = arith.constant 0 : i32
    %c0_i32_0 = arith.constant 0 : i32
    %c0_i32_1 = arith.constant 0 : i32
    return %c0_i32, %c0_i32_0 : i32, i32
  }
  func.func @transform_5(%arg0: i32) -> (i32, i32) {
    %c0_i32 = arith.constant 0 : i32
    %c0_i32_0 = arith.constant 0 : i32
    %c0_i32_1 = arith.constant 0 : i32
    return %c0_i32, %c0_i32_0 : i32, i32
  }
  func.func @transform_6(%arg0: i32) -> (i32, i32) {
    %c0_i32 = arith.constant 0 : i32
    %c0_i32_0 = arith.constant 0 : i32
    %c0_i32_1 = arith.constant 0 : i32
    return %c0_i32, %c0_i32_0 : i32, i32
  }
  func.func @transform_7(%arg0: i32) -> (i32, i32) {
    %c0_i32 = arith.constant 0 : i32
    %c0_i32_0 = arith.constant 0 : i32
    %c0_i32_1 = arith.constant 0 : i32
    return %c0_i32, %c0_i32_0 : i32, i32
  }
  func.func @transform_8(%arg0: i32) -> (i32, i32) {
    %c0_i32 = arith.constant 0 : i32
    %c0_i32_0 = arith.constant 0 : i32
    %c0_i32_1 = arith.constant 0 : i32
    return %c0_i32, %c0_i32_0 : i32, i32
  }
  func.func @transform_9(%arg0: i32) -> (i32, i32) {
    %c0_i32 = arith.constant 0 : i32
    %c0_i32_0 = arith.constant 0 : i32
    return %c0_i32, %arg0 : i32, i32
  }
}

</mosaic_0001>

<llo_original>
// kernel: rgb2normnet_r15.1
$region0: #{rgb2normnet_r15.1}
  #allocation0 [shape = 'u32[]', space=smem, size = 0x4, offset = 0x4, fixed_abs, tag = 'smem constant byte address 0x4 - core index']
  #allocation1 [shape = 'u32[144,128]{1,0:T(1,128)}', space=vmem, size = 0x12000, scoped, tag = 'internal scratch']
  %s0 = inlined_call_operand.vmem [shape: bf16[5,512], index: 0, kind: input, shape index: {}]
  %s1 = inlined_call_operand.vmem [shape: bf16[64,5], index: 1, kind: input, shape index: {}]
  %s2 = inlined_call_operand.vmem [shape: f32[64,1], index: 2, kind: input, shape index: {}]
  %s3 = inlined_call_operand.vmem [shape: bf16[64,64], index: 3, kind: input, shape index: {}]
  %s4 = inlined_call_operand.vmem [shape: f32[64,1], index: 4, kind: input, shape index: {}]
  %s5 = inlined_call_operand.vmem [shape: bf16[64,64], index: 5, kind: input, shape index: {}]
  %s6 = inlined_call_operand.vmem [shape: f32[64,1], index: 6, kind: input, shape index: {}]
  %s7 = inlined_call_operand.vmem [shape: bf16[2,64], index: 7, kind: input, shape index: {}]
  %s8 = inlined_call_operand.vmem [shape: f32[2,1], index: 8, kind: input, shape index: {}]
  %s9 = inlined_call_operand.vmem [shape: f32[2,512], index: 9, kind: output, shape index: {}]
  %s10 = sld [smem:[#allocation0]]
  $region69: #{rgb2normnet_r15.1} parent=0
    _
  %s12 = ssub.s32 1, %s10
  %s13 = scalar_select 0, %s12, %s10
  loop: start=0, step=1, limit=4
  $region2: #{rgb2normnet_r15.1} parent=0 // loop_pre_header
    _
  $region3: #{rgb2normnet_r15.1} parent=0 // loop_header
    %s15 = sphi 0, %s19
    %p16 = scmp.ge.s32.totalorder %s15, 4
    %s25 = sphi 0, %s27
    %s28 = sphi 0, %s25
    %s29 = sphi 0, %s28
    %s45 = sphi 0, %s29
    %s49 = sphi 0, %s49
    %s51 = sphi 0, %s49
    %s52 = sphi 0, %s51
    %s66 = sphi 0, %s52
    %s70 = sphi 0, %s70
    %s72 = sphi 0, %s70
    %s73 = sphi 0, %s72
    %s87 = sphi 0, %s73
    %s91 = sphi 0, %s91
    %s93 = sphi 0, %s91
    %s94 = sphi 0, %s93
    %s108 = sphi 0, %s94
    %s112 = sphi 0, %s112
    %s114 = sphi 0, %s112
    %s115 = sphi 0, %s114
    %s129 = sphi 0, %s115
    %s133 = sphi 0, %s133
    %s135 = sphi 0, %s133
    %s136 = sphi 0, %s135
    %s150 = sphi 0, %s136
    %s154 = sphi 0, %s154
    %s156 = sphi 0, %s154
    %s157 = sphi 0, %s156
    %s171 = sphi 0, %s157
    %s175 = sphi 0, %s175
    %s177 = sphi 0, %s175
    %s178 = sphi 0, %s177
    %s192 = sphi 0, %s178
    %s196 = sphi 0, %s196
    %s198 = sphi 0, %s196
    %s199 = sphi 0, %s198
    %s213 = sphi 0, %s199
    %s219 = sphi 0, %s221
    %s222 = sphi 0, %s219
    %s223 = sphi 0, %s222
    %s239 = sphi 0, %s223
  $region4: #{rgb2normnet_r15.1} parent=0 // loop_header_branch
    %18 = sbr.rel (%p16) target = $region8
  $region5: #{rgb2normnet_r15.1} parent=0 // loop_body
    %s20 = ssub.s32 %s15, 1
    %s21 = ssub.s32 %s15, 2
    %s22 = sadd.s32 %s15, 1
    %s23 = ssub.s32 %s15, %s22
    %p24 = scmp.eq.s32.totalorder %s23, 0
    %s26 = sadd.s32 %s25, 1
    %s27 = scalar_select %p24, %s25, %s26
    %p30 = pneg %p24
    %p31 = scmp.eq.s32.totalorder %s15, 1
    %p32 = por %p30, %p31
    %p33 = scmp.ne.s32.totalorder %s25, %s28
    %p34 = scmp.eq.s32.totalorder %s15, 0
    %p35 = por %p33, %p34
    %p36 = scmp.ne.s32.totalorder %s25, %s28
    %p37 = scmp.eq.s32.totalorder %s20, 1
    %p38 = por %p36, %p37
    %p39 = scmp.ne.s32.totalorder %s28, %s29
    %p40 = scmp.eq.s32.totalorder %s20, 0
    %p41 = por %p39, %p40
    %p42 = scmp.ne.s32.totalorder %s28, %s29
    %p43 = scmp.eq.s32.totalorder %s21, 1
    %p44 = por %p42, %p43
    %p46 = scmp.ne.s32.totalorder %s29, %s45
    %p47 = scmp.eq.s32.totalorder %s21, 0
    %p48 = por %p46, %p47
    %s50 = sadd.s32 %s49, 1
    %p53 = scmp.eq.s32.totalorder %s15, 1
    %p54 = scmp.ne.s32.totalorder %s49, %s51
    %p55 = scmp.eq.s32.totalorder %s15, 0
    %p56 = por %p54, %p55
    %p57 = scmp.ne.s32.totalorder %s49, %s51
    %p58 = scmp.eq.s32.totalorder %s20, 1
    %p59 = por %p57, %p58
    %p60 = scmp.ne.s32.totalorder %s51, %s52
    %p61 = scmp.eq.s32.totalorder %s20, 0
    %p62 = por %p60, %p61
    %p63 = scmp.ne.s32.totalorder %s51, %s52
    %p64 = scmp.eq.s32.totalorder %s21, 1
    %p65 = por %p63, %p64
    %p67 = scmp.ne.s32.totalorder %s52, %s66
    %p68 = scmp.eq.s32.totalorder %s21, 0
    %p69 = por %p67, %p68
    %s71 = sadd.s32 %s70, 1
    %p74 = scmp.eq.s32.totalorder %s15, 1
    %p75 = scmp.ne.s32.totalorder %s70, %s72
    %p76 = scmp.eq.s32.totalorder %s15, 0
    %p77 = por %p75, %p76
    %p78 = scmp.ne.s32.totalorder %s70, %s72
    %p79 = scmp.eq.s32.totalorder %s20, 1
    %p80 = por %p78, %p79
    %p81 = scmp.ne.s32.totalorder %s72, %s73
    %p82 = scmp.eq.s32.totalorder %s20, 0
    %p83 = por %p81, %p82
    %p84 = scmp.ne.s32.totalorder %s72, %s73
    %p85 = scmp.eq.s32.totalorder %s21, 1
    %p86 = por %p84, %p85
    %p88 = scmp.ne.s32.totalorder %s73, %s87
    %p89 = scmp.eq.s32.totalorder %s21, 0
    %p90 = por %p88, %p89
    %s92 = sadd.s32 %s91, 1
    %p95 = scmp.eq.s32.totalorder %s15, 1
    %p96 = scmp.ne.s32.totalorder %s91, %s93
    %p97 = scmp.eq.s32.totalorder %s15, 0
    %p98 = por %p96, %p97
    %p99 = scmp.ne.s32.totalorder %s91, %s93
    %p100 = scmp.eq.s32.totalorder %s20, 1
    %p101 = por %p99, %p100
    %p102 = scmp.ne.s32.totalorder %s93, %s94
    %p103 = scmp.eq.s32.totalorder %s20, 0
    %p104 = por %p102, %p103
    %p105 = scmp.ne.s32.totalorder %s93, %s94
    %p106 = scmp.eq.s32.totalorder %s21, 1
    %p107 = por %p105, %p106
    %p109 = scmp.ne.s32.totalorder %s94, %s108
    %p110 = scmp.eq.s32.totalorder %s21, 0
    %p111 = por %p109, %p110
    %s113 = sadd.s32 %s112, 1
    %p116 = scmp.eq.s32.totalorder %s15, 1
    %p117 = scmp.ne.s32.totalorder %s112, %s114
    %p118 = scmp.eq.s32.totalorder %s15, 0
    %p119 = por %p117, %p118
    %p120 = scmp.ne.s32.totalorder %s112, %s114
    %p121 = scmp.eq.s32.totalorder %s20, 1
    %p122 = por %p120, %p121
    %p123 = scmp.ne.s32.totalorder %s114, %s115
    %p124 = scmp.eq.s32.totalorder %s20, 0
    %p125 = por %p123, %p124
    %p126 = scmp.ne.s32.totalorder %s114, %s115
    %p127 = scmp.eq.s32.totalorder %s21, 1
    %p128 = por %p126, %p127
    %p130 = scmp.ne.s32.totalorder %s115, %s129
    %p131 = scmp.eq.s32.totalorder %s21, 0
    %p132 = por %p130, %p131
    %s134 = sadd.s32 %s133, 1
    %p137 = scmp.eq.s32.totalorder %s15, 1
    %p138 = scmp.ne.s32.totalorder %s133, %s135
    %p139 = scmp.eq.s32.totalorder %s15, 0
    %p140 = por %p138, %p139
    %p141 = scmp.ne.s32.totalorder %s133, %s135
    %p142 = scmp.eq.s32.totalorder %s20, 1
    %p143 = por %p141, %p142
    %p144 = scmp.ne.s32.totalorder %s135, %s136
    %p145 = scmp.eq.s32.totalorder %s20, 0
    %p146 = por %p144, %p145
    %p147 = scmp.ne.s32.totalorder %s135, %s136
    %p148 = scmp.eq.s32.totalorder %s21, 1
    %p149 = por %p147, %p148
    %p151 = scmp.ne.s32.totalorder %s136, %s150
    %p152 = scmp.eq.s32.totalorder %s21, 0
    %p153 = por %p151, %p152
    %s155 = sadd.s32 %s154, 1
    %p158 = scmp.eq.s32.totalorder %s15, 1
    %p159 = scmp.ne.s32.totalorder %s154, %s156
    %p160 = scmp.eq.s32.totalorder %s15, 0
    %p161 = por %p159, %p160
    %p162 = scmp.ne.s32.totalorder %s154, %s156
    %p163 = scmp.eq.s32.totalorder %s20, 1
    %p164 = por %p162, %p163
    %p165 = scmp.ne.s32.totalorder %s156, %s157
    %p166 = scmp.eq.s32.totalorder %s20, 0
    %p167 = por %p165, %p166
    %p168 = scmp.ne.s32.totalorder %s156, %s157
    %p169 = scmp.eq.s32.totalorder %s21, 1
    %p170 = por %p168, %p169
    %p172 = scmp.ne.s32.totalorder %s157, %s171
    %p173 = scmp.eq.s32.totalorder %s21, 0
    %p174 = por %p172, %p173
    %s176 = sadd.s32 %s175, 1
    %p179 = scmp.eq.s32.totalorder %s15, 1
    %p180 = scmp.ne.s32.totalorder %s175, %s177
    %p181 = scmp.eq.s32.totalorder %s15, 0
    %p182 = por %p180, %p181
    %p183 = scmp.ne.s32.totalorder %s175, %s177
    %p184 = scmp.eq.s32.totalorder %s20, 1
    %p185 = por %p183, %p184
    %p186 = scmp.ne.s32.totalorder %s177, %s178
    %p187 = scmp.eq.s32.totalorder %s20, 0
    %p188 = por %p186, %p187
    %p189 = scmp.ne.s32.totalorder %s177, %s178
    %p190 = scmp.eq.s32.totalorder %s21, 1
    %p191 = por %p189, %p190
    %p193 = scmp.ne.s32.totalorder %s178, %s192
    %p194 = scmp.eq.s32.totalorder %s21, 0
    %p195 = por %p193, %p194
    %s197 = sadd.s32 %s196, 1
    %p200 = scmp.eq.s32.totalorder %s15, 1
    %p201 = scmp.ne.s32.totalorder %s196, %s198
    %p202 = scmp.eq.s32.totalorder %s15, 0
    %p203 = por %p201, %p202
    %p204 = scmp.ne.s32.totalorder %s196, %s198
    %p205 = scmp.eq.s32.totalorder %s20, 1
    %p206 = por %p204, %p205
    %p207 = scmp.ne.s32.totalorder %s198, %s199
    %p208 = scmp.eq.s32.totalorder %s20, 0
    %p209 = por %p207, %p208
    %p210 = scmp.ne.s32.totalorder %s198, %s199
    %p211 = scmp.eq.s32.totalorder %s21, 1
    %p212 = por %p210, %p211
    %p214 = scmp.ne.s32.totalorder %s199, %s213
    %p215 = scmp.eq.s32.totalorder %s21, 0
    %p216 = por %p214, %p215
    %s217 = ssub.s32 %s15, %s22
    %p218 = scmp.eq.s32.totalorder %s217, 0
    %s220 = sadd.s32 %s219, 1
    %s221 = scalar_select %p218, %s219, %s220
    %p224 = pneg %p218
    %p225 = scmp.eq.s32.totalorder %s15, 1
    %p226 = por %p224, %p225
    %p227 = scmp.ne.s32.totalorder %s219, %s222
    %p228 = scmp.eq.s32.totalorder %s15, 0
    %p229 = por %p227, %p228
    %p230 = scmp.ne.s32.totalorder %s219, %s222
    %p231 = scmp.eq.s32.totalorder %s20, 1
    %p232 = por %p230, %p231
    %p233 = scmp.ne.s32.totalorder %s222, %s223
    %p234 = scmp.eq.s32.totalorder %s20, 0
    %p235 = por %p233, %p234
    %p236 = scmp.ne.s32.totalorder %s222, %s223
    %p237 = scmp.eq.s32.totalorder %s21, 1
    %p238 = por %p236, %p237
    %p240 = scmp.ne.s32.totalorder %s223, %s239
    %p241 = scmp.eq.s32.totalorder %s21, 0
    %p242 = por %p240, %p241
    %p243 = scmp.le.s32.totalorder 1, %s15
    %p244 = scmp.lt.s32.totalorder %s15, 3
    %p245 = pnand %p243, %p244
    %p246 = pneg %p245
    // Predicated region
    $region9: #{rgb2normnet_r15.1} parent=5 // pred_check
      _
    $region10: #{rgb2normnet_r15.1} parent=5 // pred_check_branch
      %248 = sbr.rel (%p245) target = $region12
    $region11: #{rgb2normnet_r15.1} parent=5 // pred_region
      %s249 = ssub.s32 %s15, 1
      // Predicated region
      $region13: #{rgb2normnet_r15.1} parent=11 // pred_check
        %p250 = pneg %p62
      $region14: #{rgb2normnet_r15.1} parent=11 // pred_check_branch
        %252 = sbr.rel (%p250) target = $region16
      $region15: #{rgb2normnet_r15.1} parent=11 // pred_region
        _
      $region16: #{rgb2normnet_r15.1} parent=11 // pred_fallthru
        _
      // Predicated region
      $region17: #{rgb2normnet_r15.1} parent=11 // pred_check
        %p253 = pneg %p83
      $region18: #{rgb2normnet_r15.1} parent=11 // pred_check_branch
        %255 = sbr.rel (%p253) target = $region20
      $region19: #{rgb2normnet_r15.1} parent=11 // pred_region
        _
      $region20: #{rgb2normnet_r15.1} parent=11 // pred_fallthru
        _
      // Predicated region
      $region21: #{rgb2normnet_r15.1} parent=11 // pred_check
        %p256 = pneg %p104
      $region22: #{rgb2normnet_r15.1} parent=11 // pred_check_branch
        %258 = sbr.rel (%p256) target = $region24
      $region23: #{rgb2normnet_r15.1} parent=11 // pred_region
        _
      $region24: #{rgb2normnet_r15.1} parent=11 // pred_fallthru
        _
      // Predicated region
      $region25: #{rgb2normnet_r15.1} parent=11 // pred_check
        %p259 = pneg %p125
      $region26: #{rgb2normnet_r15.1} parent=11 // pred_check_branch
        %261 = sbr.rel (%p259) target = $region28
      $region27: #{rgb2normnet_r15.1} parent=11 // pred_region
        _
      $region28: #{rgb2normnet_r15.1} parent=11 // pred_fallthru
        _
      // Predicated region
      $region29: #{rgb2normnet_r15.1} parent=11 // pred_check
        %p262 = pneg %p146
      $region30: #{rgb2normnet_r15.1} parent=11 // pred_check_branch
        %264 = sbr.rel (%p262) target = $region32
      $region31: #{rgb2normnet_r15.1} parent=11 // pred_region
        _
      $region32: #{rgb2normnet_r15.1} parent=11 // pred_fallthru
        _
      // Predicated region
      $region33: #{rgb2normnet_r15.1} parent=11 // pred_check
        %p265 = pneg %p167
      $region34: #{rgb2normnet_r15.1} parent=11 // pred_check_branch
        %267 = sbr.rel (%p265) target = $region36
      $region35: #{rgb2normnet_r15.1} parent=11 // pred_region
        _
      $region36: #{rgb2normnet_r15.1} parent=11 // pred_fallthru
        _
      // Predicated region
      $region37: #{rgb2normnet_r15.1} parent=11 // pred_check
        %p268 = pneg %p188
      $region38: #{rgb2normnet_r15.1} parent=11 // pred_check_branch
        %270 = sbr.rel (%p268) target = $region40
      $region39: #{rgb2normnet_r15.1} parent=11 // pred_region
        _
      $region40: #{rgb2normnet_r15.1} parent=11 // pred_fallthru
        _
      // Predicated region
      $region41: #{rgb2normnet_r15.1} parent=11 // pred_check
        %p271 = pneg %p209
      $region42: #{rgb2normnet_r15.1} parent=11 // pred_check_branch
        %273 = sbr.rel (%p271) target = $region44
      $region43: #{rgb2normnet_r15.1} parent=11 // pred_region
        _
      $region44: #{rgb2normnet_r15.1} parent=11 // pred_fallthru
        _
    $region12: #{rgb2normnet_r15.1} parent=5 // pred_fallthru
      _
    %p274 = scmp.lt.s32.totalorder %s15, 2
    // Predicated region
    $region45: #{rgb2normnet_r15.1} parent=5 // pred_check
      %p275 = pneg %p274
    $region46: #{rgb2normnet_r15.1} parent=5 // pred_check_branch
      %277 = sbr.rel (%p275) target = $region48
    $region47: #{rgb2normnet_r15.1} parent=5 // pred_region
      // Predicated region
      $region49: #{rgb2normnet_r15.1} parent=47 // pred_check
        %p278 = pneg %p35
      $region50: #{rgb2normnet_r15.1} parent=47 // pred_check_branch
        %280 = sbr.rel (%p278) target = $region52
      $region51: #{rgb2normnet_r15.1} parent=47 // pred_region
        %s281 = smul.u32 2, %s15
        %p282 = scmp.lt.s32.totalorder %s281, 3
        %s283 = scalar_select %p282, %s281, 3
        %s284 = smul.addr %s283, 4
        %s285 = scalar_lea.vmem %s0, %s284
        %s286 = smul.u32 2, %s15
      $region52: #{rgb2normnet_r15.1} parent=47 // pred_fallthru
        _
    $region48: #{rgb2normnet_r15.1} parent=5 // pred_fallthru
      _
    %p287 = scmp.le.s32.totalorder 1, %s15
    %p288 = scmp.lt.s32.totalorder %s15, 3
    %p289 = pnand %p287, %p288
    %p290 = pneg %p289
    // Predicated region
    $region53: #{rgb2normnet_r15.1} parent=5 // pred_check
      _
    $region54: #{rgb2normnet_r15.1} parent=5 // pred_check_branch
      %292 = sbr.rel (%p289) target = $region56
    $region55: #{rgb2normnet_r15.1} parent=5 // pred_region
      %s293 = ssub.s32 %s15, 1
      %s294 = smul.u32 2, %s20
      %p295 = scmp.lt.s32.totalorder %s294, 3
      %s296 = scalar_select %p295, %s294, 3
      %s297 = smul.addr %s296, 4
      %s298 = scalar_lea.vmem %s0, %s297
      %p299 = pneg %p41
      %p300 = pneg %p38
      %p301 = pneg %p62
      %p302 = pneg %p59
      %p303 = pneg %p83
      %p304 = pneg %p80
      %p305 = pneg %p104
      %p306 = pneg %p101
      %p307 = pneg %p125
      %p308 = pneg %p122
      %p309 = pneg %p146
      %p310 = pneg %p143
      %p311 = pneg %p167
      %p312 = pneg %p164
      %p313 = pneg %p188
      %p314 = pneg %p185
      %p315 = pneg %p209
      %p316 = pneg %p206
      %p317 = pneg %p235
      %p318 = pneg %p232
      %s319 = smul.u32 2, %s20
      %p320 = scmp.lt.s32.totalorder %s319, 3
      %s321 = scalar_select %p320, %s319, 3
      %s322 = smul.addr %s321, 2
      %s323 = scalar_lea.vmem %s9, %s322
      %s324 = smul.u32 2, %s20
      %p325 = scmp.lt.s32.totalorder %s324, 3
      %s326 = scalar_select %p325, %s324, 3
      %s327 = smul.addr %s326, 4
      %s328 = scalar_lea.vmem %s0, %s327
      %s329 = smul.u32 2, %s20
      %s330 = smul.u32 2, %s20
      %p331 = scmp.lt.s32.totalorder %s330, 3
      %s332 = scalar_select %p331, %s330, 3
      %s333 = smul.addr %s332, 2
      %s334 = scalar_lea.vmem %s9, %s333
      %s335 = smul.u32 2, %s20
      %v337 = vld [vmem:[%s328] sm:$0x77]
      %v338 = vld [vmem:[%s1] sm:$0xf]
      %v339 = vld [vmem:[%s1 + $0x4] sm:$0xf]
      %v340 = vld [vmem:[%s1 + $0x8] sm:$0xf]
      %v341 = vld [vmem:[%s1 + $0xc] sm:$0xf]
      %v342 = vld [vmem:[%s1 + $0x10] sm:$0xf]
      %v343 = vld [vmem:[%s1 + $0x14] sm:$0xf]
      %v344 = vld [vmem:[%s1 + $0x18] sm:$0xf]
      %v345 = vld [vmem:[%s1 + $0x1c] sm:$0xf]
      %v346 = vld [vmem:[%s2] sm:$0xff]
      %v347 = vld [vmem:[%s2 + $0x8] sm:$0xff]
      %v348 = vld [vmem:[%s2 + $0x10] sm:$0xff]
      %v349 = vld [vmem:[%s2 + $0x18] sm:$0xff]
      %v350 = vld [vmem:[%s2 + $0x20] sm:$0xff]
      %v351 = vld [vmem:[%s2 + $0x28] sm:$0xff]
      %v352 = vld [vmem:[%s2 + $0x30] sm:$0xff]
      %v353 = vld [vmem:[%s2 + $0x38] sm:$0xff]
      %355 = vset.pattern.permute.xlu0 0
      %356 = vperm.xlu0 %355, %v346
      %v357 = vpop.permute.xlu0 %356
      %360 = vset.pattern.permute.xlu0 0
      %361 = vperm.xlu0 %360, %v347
      %v362 = vpop.permute.xlu0 %361
      %365 = vset.pattern.permute.xlu0 0
      %366 = vperm.xlu0 %365, %v348
      %v367 = vpop.permute.xlu0 %366
      %370 = vset.pattern.permute.xlu0 0
      %371 = vperm.xlu0 %370, %v349
      %v372 = vpop.permute.xlu0 %371
      %375 = vset.pattern.permute.xlu0 0
      %376 = vperm.xlu0 %375, %v350
      %v377 = vpop.permute.xlu0 %376
      %380 = vset.pattern.permute.xlu0 0
      %381 = vperm.xlu0 %380, %v351
      %v382 = vpop.permute.xlu0 %381
      %385 = vset.pattern.permute.xlu0 0
      %386 = vperm.xlu0 %385, %v352
      %v387 = vpop.permute.xlu0 %386
      %390 = vset.pattern.permute.xlu0 0
      %391 = vperm.xlu0 %390, %v353
      %v392 = vpop.permute.xlu0 %391
      %v402 = vunpack.c.l.b16 %v338
      %v403 = vunpack.c.l.b16 %v339
      %v404 = vunpack.c.l.b16 %v340
      %v405 = vunpack.c.l.b16 %v341
      %v406 = vunpack.c.l.b16 %v342
      %v407 = vunpack.c.l.b16 %v343
      %v408 = vunpack.c.l.b16 %v344
      %v409 = vunpack.c.l.b16 %v345
      %v410 = vpack.c.b16 %v403, %v402
      %v411 = vpack.c.b16 %v405, %v404
      %v412 = vpack.c.b16 %v407, %v406
      %v413 = vpack.c.b16 %v409, %v408
      %v415 = vunpack.c.l.b16 %v337
      %v416 = vunpack.c.h.b16 %v337
      %v417 = vpack.c.b16 %v415, %v415
      %v418 = vpack.c.b16 %v416, %v416
      %vm419 = vcmask 39936
      %v421 = vsel %vm419, %v410, 0
      %v424 = vsel %vm419, %v411, 0
      %v427 = vsel %vm419, %v412, 0
      %v430 = vsel %vm419, %v413, 0
      %vm432 = vcmask 1041408
      %vm433 = vcmask 1042432
      %v434 = vsel %vm432, 4294967295, 65535
      %v435 = vsel %vm433, %v434, 0
      %v437 = vand.u32 %v417, %v435
      %v440 = vand.u32 %v418, %v435
      %442 = vmatprep.subr.bf16.mxu0 0
      %443 = vmatpush1.bf16.msra.mxu0 0
      %444 = vmatprep.subr.bf16.mxu0 0
      %445 = vmatpush1.bf16.msra.mxu0 0
      %446 = vmatprep.subr.bf16.mxu0 0
      %447 = vmatpush1.bf16.msra.mxu0 0
      %448 = vmatprep.subr.bf16.mxu0 0
      %449 = vmatpush1.bf16.msra.mxu0 0
      %450 = vmatprep.subr.bf16.mxu0 0
      %451 = vmatpush1.bf16.msra.mxu0 0
      %452 = vmatprep.subr.bf16.mxu0 0
      %453 = vmatpush1.bf16.msra.mxu0 0
      %454 = vmatprep.subr.bf16.mxu0 0
      %455 = vmatpush1.bf16.msra.mxu0 0
      %456 = vmatprep.subr.bf16.mxu0 %v440
      %457 = vmatpush1.bf16.msra.mxu0 %v437
      %458 = vmatprep.subr.bf16.mxu0 0
      %459 = vmatpush2.bf16.msra.mxu0 0
      %460 = vmatprep.subr.bf16.mxu0 0
      %461 = vmatpush2.bf16.msra.mxu0 0
      %462 = vmatprep.subr.bf16.mxu0 0
      %463 = vmatpush2.bf16.msra.mxu0 0
      %464 = vmatprep.subr.bf16.mxu0 0
      %465 = vmatpush2.bf16.msra.mxu0 0
      %466 = vmatprep.subr.bf16.mxu0 0
      %467 = vmatpush2.bf16.msra.mxu0 0
      %468 = vmatprep.subr.bf16.mxu0 0
      %469 = vmatpush2.bf16.msra.mxu0 0
      %470 = vmatprep.subr.bf16.mxu0 0
      %471 = vmatpush2.bf16.msra.mxu0 0
      %472 = vmatprep.subr.bf16.mxu0 0
      %473 = vmatpush2.bf16.msra.mxu0 0
      %474 = vmatprep.mubr.bf16.mxu0 0
      %475 = vmatmul.mubr.bf16.gmra.mxu0 %v421
      %v476 = vpop.f32.mrf.mxu0
      %v477 = vadd.f32 %v357, %v476
      %v478 = vpop.f32.mrf.mxu0
      %v479 = vadd.f32 %v357, %v478
      %v480 = vpop.f32.mrf.mxu0
      %v481 = vadd.f32 %v362, %v480
      %v482 = vpop.f32.mrf.mxu0
      %v483 = vadd.f32 %v362, %v482
      %484 = vmatprep.mubr.bf16.mxu0 0
      %485 = vmatmul.mubr.bf16.gmra.mxu0 %v424
      %v486 = vpop.f32.mrf.mxu0
      %v487 = vadd.f32 %v367, %v486
      %v488 = vpop.f32.mrf.mxu0
      %v489 = vadd.f32 %v367, %v488
      %v490 = vpop.f32.mrf.mxu0
      %v491 = vadd.f32 %v372, %v490
      %v492 = vpop.f32.mrf.mxu0
      %v493 = vadd.f32 %v372, %v492
      %494 = vmatprep.mubr.bf16.mxu0 0
      %495 = vmatmul.mubr.bf16.gmra.mxu0 %v427
      %v496 = vpop.f32.mrf.mxu0
      %v497 = vadd.f32 %v377, %v496
      %v498 = vpop.f32.mrf.mxu0
      %v499 = vadd.f32 %v377, %v498
      %v500 = vpop.f32.mrf.mxu0
      %v501 = vadd.f32 %v382, %v500
      %v502 = vpop.f32.mrf.mxu0
      %v503 = vadd.f32 %v382, %v502
      %504 = vmatprep.mubr.bf16.mxu0 0
      %505 = vmatmul.mubr.bf16.gmra.mxu0 %v430
      %v506 = vpop.f32.mrf.mxu0
      %v507 = vadd.f32 %v387, %v506
      %v508 = vpop.f32.mrf.mxu0
      %v509 = vadd.f32 %v387, %v508
      %v510 = vpop.f32.mrf.mxu0
      %v511 = vadd.f32 %v392, %v510
      %v512 = vpop.f32.mrf.mxu0
      %v513 = vadd.f32 %v392, %v512
      %514 = vdwg.mxu0
      %v515 = vpack.c.bf16 %v481, %v477
      %v516 = vpack.c.bf16 %v483, %v479
      %v517 = vpack.c.bf16 %v491, %v487
      %v518 = vpack.c.bf16 %v493, %v489
      %v519 = vpack.c.bf16 %v501, %v497
      %v520 = vpack.c.bf16 %v503, %v499
      %v521 = vpack.c.bf16 %v511, %v507
      %v522 = vpack.c.bf16 %v513, %v509
      %v523 = vmax.bf16 %v515, 0
      %v524 = vmax.bf16 %v516, 0
      %v525 = vmax.bf16 %v517, 0
      %v526 = vmax.bf16 %v518, 0
      %v527 = vmax.bf16 %v519, 0
      %v528 = vmax.bf16 %v520, 0
      %v529 = vmax.bf16 %v521, 0
      %v530 = vmax.bf16 %v522, 0
      %v531 = vld [vmem:[%s3] sm:$0xf]
      %v532 = vld [vmem:[%s3 + $0x4] sm:$0xf]
      %v533 = vld [vmem:[%s3 + $0x8] sm:$0xf]
      %v534 = vld [vmem:[%s3 + $0xc] sm:$0xf]
      %v535 = vld [vmem:[%s3 + $0x10] sm:$0xf]
      %v536 = vld [vmem:[%s3 + $0x14] sm:$0xf]
      %v537 = vld [vmem:[%s3 + $0x18] sm:$0xf]
      %v538 = vld [vmem:[%s3 + $0x1c] sm:$0xf]
      %v539 = vld [vmem:[%s4] sm:$0xff]
      %v540 = vld [vmem:[%s4 + $0x8] sm:$0xff]
      %v541 = vld [vmem:[%s4 + $0x10] sm:$0xff]
      %v542 = vld [vmem:[%s4 + $0x18] sm:$0xff]
      %v543 = vld [vmem:[%s4 + $0x20] sm:$0xff]
      %v544 = vld [vmem:[%s4 + $0x28] sm:$0xff]
      %v545 = vld [vmem:[%s4 + $0x30] sm:$0xff]
      %v546 = vld [vmem:[%s4 + $0x38] sm:$0xff]
      %548 = vset.pattern.permute.xlu0 0
      %549 = vperm.xlu0 %548, %v539
      %v550 = vpop.permute.xlu0 %549
      %553 = vset.pattern.permute.xlu0 0
      %554 = vperm.xlu0 %553, %v540
      %v555 = vpop.permute.xlu0 %554
      %558 = vset.pattern.permute.xlu0 0
      %559 = vperm.xlu0 %558, %v541
      %v560 = vpop.permute.xlu0 %559
      %563 = vset.pattern.permute.xlu0 0
      %564 = vperm.xlu0 %563, %v542
      %v565 = vpop.permute.xlu0 %564
      %568 = vset.pattern.permute.xlu0 0
      %569 = vperm.xlu0 %568, %v543
      %v570 = vpop.permute.xlu0 %569
      %573 = vset.pattern.permute.xlu0 0
      %574 = vperm.xlu0 %573, %v544
      %v575 = vpop.permute.xlu0 %574
      %578 = vset.pattern.permute.xlu0 0
      %579 = vperm.xlu0 %578, %v545
      %v580 = vpop.permute.xlu0 %579
      %583 = vset.pattern.permute.xlu0 0
      %584 = vperm.xlu0 %583, %v546
      %v585 = vpop.permute.xlu0 %584
      %v595 = vunpack.c.l.b16 %v531
      %v596 = vunpack.c.l.b16 %v532
      %v597 = vunpack.c.l.b16 %v533
      %v598 = vunpack.c.l.b16 %v534
      %v599 = vunpack.c.l.b16 %v535
      %v600 = vunpack.c.l.b16 %v536
      %v601 = vunpack.c.l.b16 %v537
      %v602 = vunpack.c.l.b16 %v538
      %v603 = vpack.c.b16 %v596, %v595
      %v604 = vpack.c.b16 %v598, %v597
      %v605 = vpack.c.b16 %v600, %v599
      %v606 = vpack.c.b16 %v602, %v601
      %vm607 = vcmask 523264
      %v609 = vsel %vm607, %v603, 0
      %v612 = vsel %vm607, %v604, 0
      %v615 = vsel %vm607, %v605, 0
      %v618 = vsel %vm607, %v606, 0
      %620 = vmatprep.subr.bf16.mxu0 0
      %621 = vmatpush1.bf16.msra.mxu0 0
      %622 = vmatprep.subr.bf16.mxu0 0
      %623 = vmatpush1.bf16.msra.mxu0 0
      %624 = vmatprep.subr.bf16.mxu0 0
      %625 = vmatpush1.bf16.msra.mxu0 0
      %626 = vmatprep.subr.bf16.mxu0 0
      %627 = vmatpush1.bf16.msra.mxu0 0
      %628 = vmatprep.subr.bf16.mxu0 %v530
      %629 = vmatpush1.bf16.msra.mxu0 %v529
      %630 = vmatprep.subr.bf16.mxu0 %v528
      %631 = vmatpush1.bf16.msra.mxu0 %v527
      %632 = vmatprep.subr.bf16.mxu0 %v526
      %633 = vmatpush1.bf16.msra.mxu0 %v525
      %634 = vmatprep.subr.bf16.mxu0 %v524
      %635 = vmatpush1.bf16.msra.mxu0 %v523
      %636 = vmatprep.subr.bf16.mxu0 0
      %637 = vmatpush2.bf16.msra.mxu0 0
      %638 = vmatprep.subr.bf16.mxu0 0
      %639 = vmatpush2.bf16.msra.mxu0 0
      %640 = vmatprep.subr.bf16.mxu0 0
      %641 = vmatpush2.bf16.msra.mxu0 0
      %642 = vmatprep.subr.bf16.mxu0 0
      %643 = vmatpush2.bf16.msra.mxu0 0
      %644 = vmatprep.subr.bf16.mxu0 0
      %645 = vmatpush2.bf16.msra.mxu0 0
      %646 = vmatprep.subr.bf16.mxu0 0
      %647 = vmatpush2.bf16.msra.mxu0 0
      %648 = vmatprep.subr.bf16.mxu0 0
      %649 = vmatpush2.bf16.msra.mxu0 0
      %650 = vmatprep.subr.bf16.mxu0 0
      %651 = vmatpush2.bf16.msra.mxu0 0
      %652 = vmatprep.mubr.bf16.mxu0 0
      %653 = vmatmul.mubr.bf16.gmra.mxu0 %v609
      %v654 = vpop.f32.mrf.mxu0
      %v655 = vadd.f32 %v550, %v654
      %v656 = vpop.f32.mrf.mxu0
      %v657 = vadd.f32 %v550, %v656
      %v658 = vpop.f32.mrf.mxu0
      %v659 = vadd.f32 %v555, %v658
      %v660 = vpop.f32.mrf.mxu0
      %v661 = vadd.f32 %v555, %v660
      %662 = vmatprep.mubr.bf16.mxu0 0
      %663 = vmatmul.mubr.bf16.gmra.mxu0 %v612
      %v664 = vpop.f32.mrf.mxu0
      %v665 = vadd.f32 %v560, %v664
      %v666 = vpop.f32.mrf.mxu0
      %v667 = vadd.f32 %v560, %v666
      %v668 = vpop.f32.mrf.mxu0
      %v669 = vadd.f32 %v565, %v668
      %v670 = vpop.f32.mrf.mxu0
      %v671 = vadd.f32 %v565, %v670
      %672 = vmatprep.mubr.bf16.mxu0 0
      %673 = vmatmul.mubr.bf16.gmra.mxu0 %v615
      %v674 = vpop.f32.mrf.mxu0
      %v675 = vadd.f32 %v570, %v674
      %v676 = vpop.f32.mrf.mxu0
      %v677 = vadd.f32 %v570, %v676
      %v678 = vpop.f32.mrf.mxu0
      %v679 = vadd.f32 %v575, %v678
      %v680 = vpop.f32.mrf.mxu0
      %v681 = vadd.f32 %v575, %v680
      %682 = vmatprep.mubr.bf16.mxu0 0
      %683 = vmatmul.mubr.bf16.gmra.mxu0 %v618
      %v684 = vpop.f32.mrf.mxu0
      %v685 = vadd.f32 %v580, %v684
      %v686 = vpop.f32.mrf.mxu0
      %v687 = vadd.f32 %v580, %v686
      %v688 = vpop.f32.mrf.mxu0
      %v689 = vadd.f32 %v585, %v688
      %v690 = vpop.f32.mrf.mxu0
      %v691 = vadd.f32 %v585, %v690
      %692 = vdwg.mxu0
      %v693 = vpack.c.bf16 %v659, %v655
      %v694 = vpack.c.bf16 %v661, %v657
      %v695 = vpack.c.bf16 %v669, %v665
      %v696 = vpack.c.bf16 %v671, %v667
      %v697 = vpack.c.bf16 %v679, %v675
      %v698 = vpack.c.bf16 %v681, %v677
      %v699 = vpack.c.bf16 %v689, %v685
      %v700 = vpack.c.bf16 %v691, %v687
      %v701 = vmax.bf16 %v693, 0
      %v702 = vmax.bf16 %v694, 0
      %v703 = vmax.bf16 %v695, 0
      %v704 = vmax.bf16 %v696, 0
      %v705 = vmax.bf16 %v697, 0
      %v706 = vmax.bf16 %v698, 0
      %v707 = vmax.bf16 %v699, 0
      %v708 = vmax.bf16 %v700, 0
      %v709 = vld [vmem:[%s5] sm:$0xf]
      %v710 = vld [vmem:[%s5 + $0x4] sm:$0xf]
      %v711 = vld [vmem:[%s5 + $0x8] sm:$0xf]
      %v712 = vld [vmem:[%s5 + $0xc] sm:$0xf]
      %v713 = vld [vmem:[%s5 + $0x10] sm:$0xf]
      %v714 = vld [vmem:[%s5 + $0x14] sm:$0xf]
      %v715 = vld [vmem:[%s5 + $0x18] sm:$0xf]
      %v716 = vld [vmem:[%s5 + $0x1c] sm:$0xf]
      %v717 = vld [vmem:[%s6] sm:$0xff]
      %v718 = vld [vmem:[%s6 + $0x8] sm:$0xff]
      %v719 = vld [vmem:[%s6 + $0x10] sm:$0xff]
      %v720 = vld [vmem:[%s6 + $0x18] sm:$0xff]
      %v721 = vld [vmem:[%s6 + $0x20] sm:$0xff]
      %v722 = vld [vmem:[%s6 + $0x28] sm:$0xff]
      %v723 = vld [vmem:[%s6 + $0x30] sm:$0xff]
      %v724 = vld [vmem:[%s6 + $0x38] sm:$0xff]
      %726 = vset.pattern.permute.xlu0 0
      %727 = vperm.xlu0 %726, %v717
      %v728 = vpop.permute.xlu0 %727
      %731 = vset.pattern.permute.xlu0 0
      %732 = vperm.xlu0 %731, %v718
      %v733 = vpop.permute.xlu0 %732
      %736 = vset.pattern.permute.xlu0 0
      %737 = vperm.xlu0 %736, %v719
      %v738 = vpop.permute.xlu0 %737
      %741 = vset.pattern.permute.xlu0 0
      %742 = vperm.xlu0 %741, %v720
      %v743 = vpop.permute.xlu0 %742
      %746 = vset.pattern.permute.xlu0 0
      %747 = vperm.xlu0 %746, %v721
      %v748 = vpop.permute.xlu0 %747
      %751 = vset.pattern.permute.xlu0 0
      %752 = vperm.xlu0 %751, %v722
      %v753 = vpop.permute.xlu0 %752
      %756 = vset.pattern.permute.xlu0 0
      %757 = vperm.xlu0 %756, %v723
      %v758 = vpop.permute.xlu0 %757
      %761 = vset.pattern.permute.xlu0 0
      %762 = vperm.xlu0 %761, %v724
      %v763 = vpop.permute.xlu0 %762
      %v773 = vunpack.c.l.b16 %v709
      %v774 = vunpack.c.l.b16 %v710
      %v775 = vunpack.c.l.b16 %v711
      %v776 = vunpack.c.l.b16 %v712
      %v777 = vunpack.c.l.b16 %v713
      %v778 = vunpack.c.l.b16 %v714
      %v779 = vunpack.c.l.b16 %v715
      %v780 = vunpack.c.l.b16 %v716
      %v781 = vpack.c.b16 %v774, %v773
      %v782 = vpack.c.b16 %v776, %v775
      %v783 = vpack.c.b16 %v778, %v777
      %v784 = vpack.c.b16 %v780, %v779
      %v786 = vsel %vm607, %v781, 0
      %v789 = vsel %vm607, %v782, 0
      %v792 = vsel %vm607, %v783, 0
      %v795 = vsel %vm607, %v784, 0
      %797 = vmatprep.subr.bf16.mxu0 0
      %798 = vmatpush1.bf16.msra.mxu0 0
      %799 = vmatprep.subr.bf16.mxu0 0
      %800 = vmatpush1.bf16.msra.mxu0 0
      %801 = vmatprep.subr.bf16.mxu0 0
      %802 = vmatpush1.bf16.msra.mxu0 0
      %803 = vmatprep.subr.bf16.mxu0 0
      %804 = vmatpush1.bf16.msra.mxu0 0
      %805 = vmatprep.subr.bf16.mxu0 %v708
      %806 = vmatpush1.bf16.msra.mxu0 %v707
      %807 = vmatprep.subr.bf16.mxu0 %v706
      %808 = vmatpush1.bf16.msra.mxu0 %v705
      %809 = vmatprep.subr.bf16.mxu0 %v704
      %810 = vmatpush1.bf16.msra.mxu0 %v703
      %811 = vmatprep.subr.bf16.mxu0 %v702
      %812 = vmatpush1.bf16.msra.mxu0 %v701
      %813 = vmatprep.subr.bf16.mxu0 0
      %814 = vmatpush2.bf16.msra.mxu0 0
      %815 = vmatprep.subr.bf16.mxu0 0
      %816 = vmatpush2.bf16.msra.mxu0 0
      %817 = vmatprep.subr.bf16.mxu0 0
      %818 = vmatpush2.bf16.msra.mxu0 0
      %819 = vmatprep.subr.bf16.mxu0 0
      %820 = vmatpush2.bf16.msra.mxu0 0
      %821 = vmatprep.subr.bf16.mxu0 0
      %822 = vmatpush2.bf16.msra.mxu0 0
      %823 = vmatprep.subr.bf16.mxu0 0
      %824 = vmatpush2.bf16.msra.mxu0 0
      %825 = vmatprep.subr.bf16.mxu0 0
      %826 = vmatpush2.bf16.msra.mxu0 0
      %827 = vmatprep.subr.bf16.mxu0 0
      %828 = vmatpush2.bf16.msra.mxu0 0
      %829 = vmatprep.mubr.bf16.mxu0 0
      %830 = vmatmul.mubr.bf16.gmra.mxu0 %v786
      %v831 = vpop.f32.mrf.mxu0
      %v832 = vadd.f32 %v728, %v831
      %v833 = vpop.f32.mrf.mxu0
      %v834 = vadd.f32 %v728, %v833
      %v835 = vpop.f32.mrf.mxu0
      %v836 = vadd.f32 %v733, %v835
      %v837 = vpop.f32.mrf.mxu0
      %v838 = vadd.f32 %v733, %v837
      %839 = vmatprep.mubr.bf16.mxu0 0
      %840 = vmatmul.mubr.bf16.gmra.mxu0 %v789
      %v841 = vpop.f32.mrf.mxu0
      %v842 = vadd.f32 %v738, %v841
      %v843 = vpop.f32.mrf.mxu0
      %v844 = vadd.f32 %v738, %v843
      %v845 = vpop.f32.mrf.mxu0
      %v846 = vadd.f32 %v743, %v845
      %v847 = vpop.f32.mrf.mxu0
      %v848 = vadd.f32 %v743, %v847
      %849 = vmatprep.mubr.bf16.mxu0 0
      %850 = vmatmul.mubr.bf16.gmra.mxu0 %v792
      %v851 = vpop.f32.mrf.mxu0
      %v852 = vadd.f32 %v748, %v851
      %v853 = vpop.f32.mrf.mxu0
      %v854 = vadd.f32 %v748, %v853
      %v855 = vpop.f32.mrf.mxu0
      %v856 = vadd.f32 %v753, %v855
      %v857 = vpop.f32.mrf.mxu0
      %v858 = vadd.f32 %v753, %v857
      %859 = vmatprep.mubr.bf16.mxu0 0
      %860 = vmatmul.mubr.bf16.gmra.mxu0 %v795
      %v861 = vpop.f32.mrf.mxu0
      %v862 = vadd.f32 %v758, %v861
      %v863 = vpop.f32.mrf.mxu0
      %v864 = vadd.f32 %v758, %v863
      %v865 = vpop.f32.mrf.mxu0
      %v866 = vadd.f32 %v763, %v865
      %v867 = vpop.f32.mrf.mxu0
      %v868 = vadd.f32 %v763, %v867
      %869 = vdwg.mxu0
      %v870 = vpack.c.bf16 %v836, %v832
      %v871 = vpack.c.bf16 %v838, %v834
      %v872 = vpack.c.bf16 %v846, %v842
      %v873 = vpack.c.bf16 %v848, %v844
      %v874 = vpack.c.bf16 %v856, %v852
      %v875 = vpack.c.bf16 %v858, %v854
      %v876 = vpack.c.bf16 %v866, %v862
      %v877 = vpack.c.bf16 %v868, %v864
      %v878 = vmax.bf16 %v870, 0
      %v879 = vmax.bf16 %v871, 0
      %v880 = vmax.bf16 %v872, 0
      %v881 = vmax.bf16 %v873, 0
      %v882 = vmax.bf16 %v874, 0
      %v883 = vmax.bf16 %v875, 0
      %v884 = vmax.bf16 %v876, 0
      %v885 = vmax.bf16 %v877, 0
      %v886 = vld [vmem:[%s7] sm:$0x1]
      %v887 = vld [vmem:[%s8] sm:$0x3]
      %889 = vset.pattern.permute.xlu0 0
      %890 = vperm.xlu0 %889, %v887
      %v891 = vpop.permute.xlu0 %890
      %v894 = vsel %vm607, %v886, 0
      %896 = vmatprep.subr.bf16.mxu0 0
      %897 = vmatpush1.bf16.msra.mxu0 0
      %898 = vmatprep.subr.bf16.mxu0 0
      %899 = vmatpush1.bf16.msra.mxu0 0
      %900 = vmatprep.subr.bf16.mxu0 0
      %901 = vmatpush1.bf16.msra.mxu0 0
      %902 = vmatprep.subr.bf16.mxu0 0
      %903 = vmatpush1.bf16.msra.mxu0 0
      %904 = vmatprep.subr.bf16.mxu0 %v885
      %905 = vmatpush1.bf16.msra.mxu0 %v884
      %906 = vmatprep.subr.bf16.mxu0 %v883
      %907 = vmatpush1.bf16.msra.mxu0 %v882
      %908 = vmatprep.subr.bf16.mxu0 %v881
      %909 = vmatpush1.bf16.msra.mxu0 %v880
      %910 = vmatprep.subr.bf16.mxu0 %v879
      %911 = vmatpush1.bf16.msra.mxu0 %v878
      %912 = vmatprep.subr.bf16.mxu0 0
      %913 = vmatpush2.bf16.msra.mxu0 0
      %914 = vmatprep.subr.bf16.mxu0 0
      %915 = vmatpush2.bf16.msra.mxu0 0
      %916 = vmatprep.subr.bf16.mxu0 0
      %917 = vmatpush2.bf16.msra.mxu0 0
      %918 = vmatprep.subr.bf16.mxu0 0
      %919 = vmatpush2.bf16.msra.mxu0 0
      %920 = vmatprep.subr.bf16.mxu0 0
      %921 = vmatpush2.bf16.msra.mxu0 0
      %922 = vmatprep.subr.bf16.mxu0 0
      %923 = vmatpush2.bf16.msra.mxu0 0
      %924 = vmatprep.subr.bf16.mxu0 0
      %925 = vmatpush2.bf16.msra.mxu0 0
      %926 = vmatprep.subr.bf16.mxu0 0
      %927 = vmatpush2.bf16.msra.mxu0 0
      %928 = vmatprep.mubr.bf16.mxu0 0
      %929 = vmatmul.mubr.bf16.gmra.mxu0 %v894
      %v930 = vpop.f32.mrf.mxu0
      %v931 = vadd.f32 %v891, %v930
      %v932 = vpop.f32.mrf.mxu0
      %v933 = vadd.f32 %v891, %v932
      %v934 = vpop.f32.mrf.mxu0
      %v935 = vpop.f32.mrf.mxu0
      %936 = vdwg.mxu0
      %v939 = vcombine.low %v931, %v933
      %v941 = vunpack.c.l.s4 1983009808
      %v942 = vunpack.c.0.s8 %v941
      %v943 = vlaneseq
      %v944 = vshrl.u32 %v943, 7
      %v945 = vsub.s32 %v942, %v944
      %v946 = vrot.slane %v939, %v945
      %948 = vst [vmem:[%s334] sm:$0xf] %v946
      %s949 = smul.u32 2, %s20
      %p950 = scmp.lt.s32.totalorder %s949, 3
      %s951 = scalar_select %p950, %s949, 3
      %s952 = smul.addr %s951, 2
      %s953 = scalar_lea.vmem %s9, %s952
      // Predicated region
      $region57: #{rgb2normnet_r15.1} parent=55 // pred_check
        %p954 = pneg %p232
      $region58: #{rgb2normnet_r15.1} parent=55 // pred_check_branch
        %956 = sbr.rel (%p954) target = $region60
      $region59: #{rgb2normnet_r15.1} parent=55 // pred_region
        %s957 = smul.u32 2, %s20
      $region60: #{rgb2normnet_r15.1} parent=55 // pred_fallthru
        _
    $region56: #{rgb2normnet_r15.1} parent=5 // pred_fallthru
      _
    %p958 = scmp.le.s32.totalorder 2, %s15
    // Predicated region
    $region61: #{rgb2normnet_r15.1} parent=5 // pred_check
      %p959 = pneg %p958
    $region62: #{rgb2normnet_r15.1} parent=5 // pred_check_branch
      %961 = sbr.rel (%p959) target = $region64
    $region63: #{rgb2normnet_r15.1} parent=5 // pred_region
      %s962 = ssub.s32 %s15, 2
      // Predicated region
      $region65: #{rgb2normnet_r15.1} parent=63 // pred_check
        %p963 = pneg %p238
      $region66: #{rgb2normnet_r15.1} parent=63 // pred_check_branch
        %965 = sbr.rel (%p963) target = $region68
      $region67: #{rgb2normnet_r15.1} parent=63 // pred_region
        %s966 = smul.u32 2, %s21
        %p967 = scmp.lt.s32.totalorder %s966, 3
        %s968 = scalar_select %p967, %s966, 3
        %s969 = smul.addr %s968, 2
        %s970 = scalar_lea.vmem %s9, %s969
      $region68: #{rgb2normnet_r15.1} parent=63 // pred_fallthru
        _
    $region64: #{rgb2normnet_r15.1} parent=5 // pred_fallthru
      _
  $region6: #{rgb2normnet_r15.1} parent=0 // loop_footer
    %s19 = sadd.s32 1, %s15
  $region7: #{rgb2normnet_r15.1} parent=0 // loop_footer_branch
    %14 = sbr.rel target = $region3
  $region8: #{rgb2normnet_r15.1} parent=0 // loop_exit
    _

</llo_original>
